<compile_context>
chip_gen: v7x
topology: tpu7x:2x2x1
jax: 0.10.0
libtpu: 0.0.40
codegen_flags: <defaults>
</compile_context>

<pallas_src>
import jax
import jax.numpy as jnp
from jax.experimental import pallas as pl
from jax.experimental.pallas import tpu as pltpu


def _round_up(x, m):
    return ((x + m - 1) // m) * m


def _cdiv(a, b):
    return (a + b - 1) // b


# ---------------------------------------------------------------------------
# Bilinear 2x upsample (align_corners=True) — separable, one pallas_call.
# ---------------------------------------------------------------------------
def _linear_interp_matrix(n_out, n_in):
    """Row-stochastic (n_out, n_in) matrix for 1-D linear interp, align_corners=True."""
    if n_in == 1:
        return jnp.ones((n_out, 1), jnp.float32)
    pos = jnp.arange(n_out, dtype=jnp.float32) * (n_in - 1) / (n_out - 1)
    i0 = jnp.clip(jnp.floor(pos).astype(jnp.int32), 0, n_in - 2)
    frac = pos - i0.astype(jnp.float32)
    rows = jnp.arange(n_out)
    m = jnp.zeros((n_out, n_in), jnp.float32)
    m = m.at[rows, i0].add(1.0 - frac)
    m = m.at[rows, i0 + 1].add(frac)
    return m


def _upsample_kernel(x_ref, ah_ref, awt_ref, o_ref):
    # x_ref:   (B*H1, W1)  all images stacked onto the matmul M axis (W pass)
    # ah_ref:  (H2, H1)    row-interpolation matrix
    # awt_ref: (W1, W2)    column-interpolation matrix, transposed
    # o_ref:   (B, H2, W2)
    B, H2, W2 = o_ref.shape
    H1 = ah_ref.shape[1]
    # W pass: single stacked matmul (M = B*H1 rows).
    xw = jnp.dot(x_ref[...], awt_ref[...], preferred_element_type=jnp.float32)
    ah = ah_ref[...]
    # H pass: one small matmul per image (B is small and static).
    for b in range(B):
        o_ref[b] = jnp.dot(
            ah, xw[b * H1:(b + 1) * H1, :],
            preferred_element_type=jnp.float32,
        ).astype(o_ref.dtype)


def bilinear_upsample_2x(x):
    """x: (N, C, H, W) -> (N, C, 2H, 2W), PyTorch bilinear align_corners=True."""
    N, C, H, W = x.shape
    H2, W2 = 2 * H, 2 * W
    A_h = _linear_interp_matrix(H2, H)            # (H2, H)
    A_wT = _linear_interp_matrix(W2, W).T         # (W, W2)
    B = N * C
    x2d = x.reshape(B * H, W).astype(jnp.float32)

    out = pl.pallas_call(
        _upsample_kernel,
        out_shape=jax.ShapeDtypeStruct((B, H2, W2), jnp.float32),
        grid_spec=pltpu.PrefetchScalarGridSpec(
            num_scalar_prefetch=0,
            grid=(1,),
            in_specs=[
                pl.BlockSpec((B * H, W), lambda i: (0, 0)),
                pl.BlockSpec((H2, H), lambda i: (0, 0)),
                pl.BlockSpec((W, W2), lambda i: (0, 0)),
            ],
            out_specs=pl.BlockSpec((B, H2, W2), lambda i: (0, 0, 0)),
        ),
        compiler_params=pltpu.CompilerParams(dimension_semantics=("arbitrary",)),
        cost_estimate=pl.CostEstimate(
            flops=2 * B * H * W * W2 + 2 * B * H2 * H * W2,
            transcendentals=0,
            bytes_accessed=4 * (B * H * W + H2 * H + W * W2 + B * H2 * W2),
        ),
    )(x2d, A_h, A_wT)
    return out.reshape(N, C, H2, W2).astype(x.dtype)


# ---------------------------------------------------------------------------
# Fused DoubleConv: (conv3x3 + BN + ReLU) x 2 in one kernel per batch element.
# Width-wrap flattened layout: padded image (Hp, Wp) flattened onto the lane
# axis so every conv tap is one contiguous lane slice of length hw_out.
# ---------------------------------------------------------------------------
def _make_fused_doubleconv_kernel(Wp, hw, C2p, C1p, Cmp, K1, K2):
    taps = [(dh, dw) for dh in range(3) for dw in range(3)]

    def kernel(x2f_ref, x1f_ref, w1_ref, b1_ref, w2_ref, b2_ref, mask_ref,
               o_ref, patch_ref, mid_ref):
        # x2f_ref: (1, C2p, L)  padded+flattened skip features
        # x1f_ref: (1, C1p, L)  padded+flattened upsampled deep features
        # w1_ref:  (Cmp, K1)    stage-1 weight, BN-folded, tap-packed (2 groups)
        # b1_ref:  (Cmp, 1)     stage-1 folded BN bias
        # w2_ref:  (Cout, K2)   stage-2 weight, BN-folded, tap-packed
        # b2_ref:  (Cout, 1)
        # mask_ref:(1, hw)      1.0 on valid output lanes, 0.0 on wrap/tail junk
        # o_ref:   (1, Cout, hw)
        # patch_ref: VMEM (max(K1,K2), hw) tap-packed patch (reused by stage 2)
        # mid_ref:   VMEM (Cmp, L) zero-haloed stage-1 output (stays in VMEM)

        # ---- stage 1: assemble tap-packed patch from the two Cin groups ----
        for t, (dh, dw) in enumerate(taps):
            off = dh * Wp + dw
            patch_ref[t * C2p:(t + 1) * C2p, :] = x2f_ref[0, :, off:off + hw]
        base = 9 * C2p
        for t, (dh, dw) in enumerate(taps):
            off = dh * Wp + dw
            patch_ref[base + t * C1p:base + (t + 1) * C1p, :] = (
                x1f_ref[0, :, off:off + hw])

        # One MXU matmul (K = 9*(C2p+C1p)) + bias + ReLU, then zero the junk
        # lanes so they can act as the zero halo of the stage-2 input.
        y1 = jnp.dot(w1_ref[...], patch_ref[0:K1, :],
                     preferred_element_type=jnp.float32)
        y1 = jnp.maximum(y1 + b1_ref[...], 0.0) * mask_ref[...]

        # ---- re-halo the intermediate entirely in VMEM --------------------
        # Output lane j = r*Wp + c maps to padded-layout lane (r+1)*Wp + (c+1),
        # i.e. a single shift by Wp+1; masked junk lanes land exactly on the
        # halo positions and write zeros.
        mid_ref[...] = jnp.zeros_like(mid_ref)
        mid_ref[:, Wp + 1:Wp + 1 + hw] = y1

        # ---- stage 2: tap-packed patch from the VMEM intermediate ----------
        for t, (dh, dw) in enumerate(taps):
            off = dh * Wp + dw
            patch_ref[t * Cmp:(t + 1) * Cmp, :] = mid_ref[:, off:off + hw]
        y2 = jnp.dot(w2_ref[...], patch_ref[0:K2, :],
                     preferred_element_type=jnp.float32)
        o_ref[0] = jnp.maximum(y2 + b2_ref[...], 0.0).astype(o_ref.dtype)

    return kernel


def double_conv_fused(x2, x1u, p, eps=1e-5):
    """x2: (N, C2, H, W) skip; x1u: (N, C1, Hu, Wu) upsampled deep (Hu<=H, Wu<=W).
    Applies F.pad(x1u) to (H, W), channel-concat (implicitly), then two fused
    conv3x3+BN(eval)+ReLU stages. Returns (N, Cout, H, W)."""
    N, C2, H, W = x2.shape
    _, C1, Hu, Wu = x1u.shape
    Cmid = p["w1"].shape[0]
    Cout = p["w2"].shape[0]
    assert p["w1"].shape[1] == C2 + C1

    Wp = W + 2
    HWp = H * Wp
    hw_out = _round_up(HWp, 128)          # 128-aligned => lane-dense stores
    max_off = 2 * Wp + 2
    rows = max(_cdiv(max_off + hw_out, Wp), H + 2)
    L = rows * Wp
    pr = rows - (H + 2)                   # extra zero rows folded into the pad

    diffY = H - Hu
    diffX = W - Wu

    # Channel counts padded to multiples of 8 so every tap-block store in the
    # patch scratch is sublane-aligned.
    C2p = _round_up(C2, 8)
    C1p = _round_up(C1, 8)
    Cmp = _round_up(Cmid, 8)
    K1 = 9 * (C2p + C1p)
    K2 = 9 * Cmp
    Kmax = max(K1, K2)

    f32 = jnp.float32
    # ONE jnp.pad per input: channel pad + conv halo (+ F.pad diff for x1u)
    # + extra bottom rows so the flattened tail covers every tap slice.
    x2f = jnp.pad(x2.astype(f32),
                  ((0, 0), (0, C2p - C2), (1, 1 + pr), (1, 1))
                  ).reshape(N, C2p, L)
    x1f = jnp.pad(x1u.astype(f32),
                  ((0, 0), (0, C1p - C1),
                   (1 + diffY // 2, 1 + (diffY - diffY // 2) + pr),
                   (1 + diffX // 2, 1 + (diffX - diffX // 2)))
                  ).reshape(N, C1p, L)

    # Fold BatchNorm (eval) into weights/bias; tap-pack (Cout, 9*Cin) layout.
    s1 = p["g1"] / jnp.sqrt(p["v1"] + eps)
    bias1 = p["b1"] - p["m1"] * s1
    w1 = p["w1"] * s1[:, None, None, None]
    w1a = jnp.pad(w1[:, :C2], ((0, Cmp - Cmid), (0, C2p - C2), (0, 0), (0, 0)))
    w1b = jnp.pad(w1[:, C2:], ((0, Cmp - Cmid), (0, C1p - C1), (0, 0), (0, 0)))
    w1p = jnp.concatenate(
        [jnp.transpose(w1a, (0, 2, 3, 1)).reshape(Cmp, 9 * C2p),
         jnp.transpose(w1b, (0, 2, 3, 1)).reshape(Cmp, 9 * C1p)],
        axis=1).astype(f32)                                   # (Cmp, K1)
    b1p = jnp.pad(bias1, (0, Cmp - Cmid)).reshape(Cmp, 1).astype(f32)

    s2 = p["g2"] / jnp.sqrt(p["v2"] + eps)
    bias2 = p["b2"] - p["m2"] * s2
    w2 = p["w2"] * s2[:, None, None, None]
    w2p = jnp.transpose(
        jnp.pad(w2, ((0, 0), (0, Cmp - Cmid), (0, 0), (0, 0))),
        (0, 2, 3, 1)).reshape(Cout, K2).astype(f32)            # (Cout, K2)
    b2p = bias2.reshape(Cout, 1).astype(f32)

    # Valid-lane mask (zeroes the width-wrap columns and the 128-align tail).
    j = jnp.arange(hw_out)
    mask = ((j < HWp) & (j % Wp < W)).astype(f32).reshape(1, hw_out)

    kernel = _make_fused_doubleconv_kernel(Wp, hw_out, C2p, C1p, Cmp, K1, K2)
    out = pl.pallas_call(
        kernel,
        out_shape=jax.ShapeDtypeStruct((N, Cout, hw_out), x2.dtype),
        grid_spec=pltpu.PrefetchScalarGridSpec(
            num_scalar_prefetch=0,
            grid=(N,),
            in_specs=[
                pl.BlockSpec((1, C2p, L), lambda n: (n, 0, 0)),
                pl.BlockSpec((1, C1p, L), lambda n: (n, 0, 0)),
                pl.BlockSpec((Cmp, K1), lambda n: (0, 0)),
                pl.BlockSpec((Cmp, 1), lambda n: (0, 0)),
                pl.BlockSpec((Cout, K2), lambda n: (0, 0)),
                pl.BlockSpec((Cout, 1), lambda n: (0, 0)),
                pl.BlockSpec((1, hw_out), lambda n: (0, 0)),
            ],
            out_specs=pl.BlockSpec((1, Cout, hw_out), lambda n: (n, 0, 0)),
            scratch_shapes=[
                pltpu.VMEM((Kmax, hw_out), jnp.float32),   # tap-packed patch
                pltpu.VMEM((Cmp, L), jnp.float32),         # haloed intermediate
            ],
        ),
        compiler_params=pltpu.CompilerParams(dimension_semantics=("parallel",)),
        cost_estimate=pl.CostEstimate(
            flops=2 * N * hw_out * (Cmp * K1 + Cout * K2),
            transcendentals=0,
            bytes_accessed=4 * (N * (C2p + C1p) * L + N * Cout * hw_out
                                + Cmp * K1 + Cout * K2 + hw_out),
        ),
    )(x2f, x1f, w1p, b1p, w2p, b2p, mask)

    # Drop wrap / alignment junk columns, restore (N, Cout, H, W).
    return out[:, :, :HWp].reshape(N, Cout, H, Wp)[:, :, :, :W]


# ---------------------------------------------------------------------------
# Up_FADC forward
# ---------------------------------------------------------------------------
def up_fadc_forward(x1, x2, p):
    """x1: deep features (N, C1, H1, W1); x2: skip features (N, C2, ~2H1, ~2W1)."""
    x1u = bilinear_upsample_2x(x1)
    # TODO(synk): AdaptiveDilatedConv (FADC) approximated by a standard 3x3 conv.
    return double_conv_fused(x2, x1u, p)


# ---------------------------------------------------------------------------
# Pure-JAX reference (PyTorch eval semantics; default matmul/conv precision)
# ---------------------------------------------------------------------------
def _ref_forward(x1, x2, p, eps=1e-5):
    N, C1, H1, W1 = x1.shape
    A_h = _linear_interp_matrix(2 * H1, H1)
    A_w = _linear_interp_matrix(2 * W1, W1)
    t = jnp.einsum("Hh,nchw->ncHw", A_h, x1)
    x1u = jnp.einsum("ncHw,Ww->ncHW", t, A_w)
    dY = x2.shape[2] - x1u.shape[2]
    dX = x2.shape[3] - x1u.shape[3]
    x1u = jnp.pad(x1u, ((0, 0), (0, 0),
                        (dY // 2, dY - dY // 2), (dX // 2, dX - dX // 2)))
    x = jnp.concatenate([x2, x1u], axis=1)

    def conv_bn_relu(x, w, g, b, m, v):
        s = g / jnp.sqrt(v + eps)
        wf = w * s[:, None, None, None]
        bias = b - m * s
        y = jax.lax.conv_general_dilated(
            x, wf, (1, 1), ((1, 1), (1, 1)),
            dimension_numbers=("NCHW", "OIHW", "NCHW"))
        return jnp.maximum(y + bias[None, :, None, None], 0.0)

    y = conv_bn_relu(x, p["w1"], p["g1"], p["b1"], p["m1"], p["v1"])
    y = conv_bn_relu(y, p["w2"], p["g2"], p["b2"], p["m2"], p["v2"])
    return y


if __name__ == "__main__":
    key = jax.random.PRNGKey(0)
    N = 2
    C_deep, C_skip = 4, 4          # x1 (deep) and x2 (skip) channels
    H1, W1 = 8, 8                  # deep spatial size
    H2, W2 = 16, 16                # skip spatial size (2x)
    in_ch = C_skip + C_deep        # Up_FADC in_channels = 8
    mid_ch = in_ch // 2            # 4
    out_ch = 8

    k1, k2, k3, k4 = jax.random.split(key, 4)
    x1 = jax.random.normal(k1, (N, C_deep, H1, W1), dtype=jnp.float32)
    x2 = jax.random.normal(k2, (N, C_skip, H2, W2), dtype=jnp.float32)
    w1 = jax.random.normal(k3, (mid_ch, in_ch, 3, 3), dtype=jnp.float32) * 0.1
    w2 = jax.random.normal(k4, (out_ch, mid_ch, 3, 3), dtype=jnp.float32) * 0.1

    params = dict(
        w1=w1,
        g1=jnp.linspace(0.5, 1.5, mid_ch, dtype=jnp.float32),
        b1=jnp.linspace(-0.1, 0.1, mid_ch, dtype=jnp.float32),
        m1=jnp.linspace(-0.05, 0.05, mid_ch, dtype=jnp.float32),
        v1=jnp.linspace(0.9, 1.1, mid_ch, dtype=jnp.float32),
        w2=w2,
        g2=jnp.linspace(0.5, 1.5, out_ch, dtype=jnp.float32),
        b2=jnp.linspace(-0.1, 0.1, out_ch, dtype=jnp.float32),
        m2=jnp.linspace(-0.05, 0.05, out_ch, dtype=jnp.float32),
        v2=jnp.linspace(0.9, 1.1, out_ch, dtype=jnp.float32),
    )

    out = up_fadc_forward(x1, x2, params)
    jax.block_until_ready(out)

    ref = _ref_forward(x1, x2, params)
    assert out.shape == (N, out_ch, H2, W2), out.shape
    max_err = float(jnp.max(jnp.abs(out - ref)))
    # Tolerance covers the (default / single-pass bf16) MXU precision used by
    # both the kernel and the XLA reference.
    assert jnp.allclose(out, ref, atol=2e-2, rtol=2e-2), max_err

    print("KERNEL_OK")
</pallas_src>

<mosaic_0001>
module attributes {stable_mosaic.version = 11 : i64} {
  func.func @_upsample_kernel(%arg0: i32, %arg1: memref<64x8xf32, #tpu.memory_space<vmem>>, %arg2: memref<16x8xf32, #tpu.memory_space<vmem>>, %arg3: memref<8x16xf32, #tpu.memory_space<vmem>>, %arg4: memref<8x16x16xf32, #tpu.memory_space<vmem>>) attributes {dimension_semantics = [#tpu.dimension_semantics<arbitrary>], iteration_bounds = array<i64: 1>, scalar_prefetch = 0 : i64, scratch_operands = 0 : i64, tpu.core_type = #tpu.core_type<tc>, window_params = [{pipeline_mode = #tpu.pipeline_mode<synchronous>, transform_indices = @transform_0, window_bounds = array<i64: 64, 8>}, {pipeline_mode = #tpu.pipeline_mode<synchronous>, transform_indices = @transform_1, window_bounds = array<i64: 16, 8>}, {pipeline_mode = #tpu.pipeline_mode<synchronous>, transform_indices = @transform_2, window_bounds = array<i64: 8, 16>}, {pipeline_mode = #tpu.pipeline_mode<synchronous>, transform_indices = @transform_3, window_bounds = array<i64: 8, 16, 16>}]} {
    %c0 = arith.constant 0 : index
    %c0_0 = arith.constant 0 : index
    %0 = vector.load %arg1[%c0, %c0_0] : memref<64x8xf32, #tpu.memory_space<vmem>>, vector<64x8xf32>
    %c0_1 = arith.constant 0 : index
    %c0_2 = arith.constant 0 : index
    %1 = vector.load %arg3[%c0_1, %c0_2] : memref<8x16xf32, #tpu.memory_space<vmem>>, vector<8x16xf32>
    %cst = arith.constant dense<0.000000e+00> : vector<64x16xf32>
    %2 = tpu.matmul %0, %1, %cst {dimension_numbers = #tpu.dot_dimension_numbers<[1], [0], [0], [1], [0, 0, 1, 1], [], []>} : vector<64x8xf32>, vector<8x16xf32>, vector<64x16xf32> -> vector<64x16xf32>
    %c0_3 = arith.constant 0 : index
    %c0_4 = arith.constant 0 : index
    %3 = vector.load %arg2[%c0_3, %c0_4] : memref<16x8xf32, #tpu.memory_space<vmem>>, vector<16x8xf32>
    %4 = vector.extract_strided_slice %2 {offsets = [0, 0], sizes = [8, 16], strides = [1, 1]} : vector<64x16xf32> to vector<8x16xf32>
    %cst_5 = arith.constant dense<0.000000e+00> : vector<16x16xf32>
    %5 = tpu.matmul %3, %4, %cst_5 {dimension_numbers = #tpu.dot_dimension_numbers<[1], [0], [0], [1], [0, 0, 1, 1], [], []>} : vector<16x8xf32>, vector<8x16xf32>, vector<16x16xf32> -> vector<16x16xf32>
    %c0_6 = arith.constant 0 : index
    %c0_7 = arith.constant 0 : index
    %c0_8 = arith.constant 0 : index
    %6 = vector.load %arg4[%c0_6, %c0_7, %c0_8] : memref<8x16x16xf32, #tpu.memory_space<vmem>>, vector<1x16x16xf32>
    %7 = vector.shape_cast %6 : vector<1x16x16xf32> to vector<16x16xf32>
    %8 = vector.shape_cast %5 : vector<16x16xf32> to vector<1x16x16xf32>
    tpu.vector_store %arg4[%c0_6, %c0_7, %c0_8], %8 {strides = array<i32>} : memref<8x16x16xf32, #tpu.memory_space<vmem>>, vector<1x16x16xf32>,
    %9 = vector.extract_strided_slice %2 {offsets = [8, 0], sizes = [8, 16], strides = [1, 1]} : vector<64x16xf32> to vector<8x16xf32>
    %cst_9 = arith.constant dense<0.000000e+00> : vector<16x16xf32>
    %10 = tpu.matmul %3, %9, %cst_9 {dimension_numbers = #tpu.dot_dimension_numbers<[1], [0], [0], [1], [0, 0, 1, 1], [], []>} : vector<16x8xf32>, vector<8x16xf32>, vector<16x16xf32> -> vector<16x16xf32>
    %c1 = arith.constant 1 : index
    %c0_10 = arith.constant 0 : index
    %c0_11 = arith.constant 0 : index
    %11 = vector.load %arg4[%c1, %c0_10, %c0_11] : memref<8x16x16xf32, #tpu.memory_space<vmem>>, vector<1x16x16xf32>
    %12 = vector.shape_cast %11 : vector<1x16x16xf32> to vector<16x16xf32>
    %13 = vector.shape_cast %10 : vector<16x16xf32> to vector<1x16x16xf32>
    tpu.vector_store %arg4[%c1, %c0_10, %c0_11], %13 {strides = array<i32>} : memref<8x16x16xf32, #tpu.memory_space<vmem>>, vector<1x16x16xf32>,
    %14 = vector.extract_strided_slice %2 {offsets = [16, 0], sizes = [8, 16], strides = [1, 1]} : vector<64x16xf32> to vector<8x16xf32>
    %cst_12 = arith.constant dense<0.000000e+00> : vector<16x16xf32>
    %15 = tpu.matmul %3, %14, %cst_12 {dimension_numbers = #tpu.dot_dimension_numbers<[1], [0], [0], [1], [0, 0, 1, 1], [], []>} : vector<16x8xf32>, vector<8x16xf32>, vector<16x16xf32> -> vector<16x16xf32>
    %c2 = arith.constant 2 : index
    %c0_13 = arith.constant 0 : index
    %c0_14 = arith.constant 0 : index
    %16 = vector.load %arg4[%c2, %c0_13, %c0_14] : memref<8x16x16xf32, #tpu.memory_space<vmem>>, vector<1x16x16xf32>
    %17 = vector.shape_cast %16 : vector<1x16x16xf32> to vector<16x16xf32>
    %18 = vector.shape_cast %15 : vector<16x16xf32> to vector<1x16x16xf32>
    tpu.vector_store %arg4[%c2, %c0_13, %c0_14], %18 {strides = array<i32>} : memref<8x16x16xf32, #tpu.memory_space<vmem>>, vector<1x16x16xf32>,
    %19 = vector.extract_strided_slice %2 {offsets = [24, 0], sizes = [8, 16], strides = [1, 1]} : vector<64x16xf32> to vector<8x16xf32>
    %cst_15 = arith.constant dense<0.000000e+00> : vector<16x16xf32>
    %20 = tpu.matmul %3, %19, %cst_15 {dimension_numbers = #tpu.dot_dimension_numbers<[1], [0], [0], [1], [0, 0, 1, 1], [], []>} : vector<16x8xf32>, vector<8x16xf32>, vector<16x16xf32> -> vector<16x16xf32>
    %c3 = arith.constant 3 : index
    %c0_16 = arith.constant 0 : index
    %c0_17 = arith.constant 0 : index
    %21 = vector.load %arg4[%c3, %c0_16, %c0_17] : memref<8x16x16xf32, #tpu.memory_space<vmem>>, vector<1x16x16xf32>
    %22 = vector.shape_cast %21 : vector<1x16x16xf32> to vector<16x16xf32>
    %23 = vector.shape_cast %20 : vector<16x16xf32> to vector<1x16x16xf32>
    tpu.vector_store %arg4[%c3, %c0_16, %c0_17], %23 {strides = array<i32>} : memref<8x16x16xf32, #tpu.memory_space<vmem>>, vector<1x16x16xf32>,
    %24 = vector.extract_strided_slice %2 {offsets = [32, 0], sizes = [8, 16], strides = [1, 1]} : vector<64x16xf32> to vector<8x16xf32>
    %cst_18 = arith.constant dense<0.000000e+00> : vector<16x16xf32>
    %25 = tpu.matmul %3, %24, %cst_18 {dimension_numbers = #tpu.dot_dimension_numbers<[1], [0], [0], [1], [0, 0, 1, 1], [], []>} : vector<16x8xf32>, vector<8x16xf32>, vector<16x16xf32> -> vector<16x16xf32>
    %c4 = arith.constant 4 : index
    %c0_19 = arith.constant 0 : index
    %c0_20 = arith.constant 0 : index
    %26 = vector.load %arg4[%c4, %c0_19, %c0_20] : memref<8x16x16xf32, #tpu.memory_space<vmem>>, vector<1x16x16xf32>
    %27 = vector.shape_cast %26 : vector<1x16x16xf32> to vector<16x16xf32>
    %28 = vector.shape_cast %25 : vector<16x16xf32> to vector<1x16x16xf32>
    tpu.vector_store %arg4[%c4, %c0_19, %c0_20], %28 {strides = array<i32>} : memref<8x16x16xf32, #tpu.memory_space<vmem>>, vector<1x16x16xf32>,
    %29 = vector.extract_strided_slice %2 {offsets = [40, 0], sizes = [8, 16], strides = [1, 1]} : vector<64x16xf32> to vector<8x16xf32>
    %cst_21 = arith.constant dense<0.000000e+00> : vector<16x16xf32>
    %30 = tpu.matmul %3, %29, %cst_21 {dimension_numbers = #tpu.dot_dimension_numbers<[1], [0], [0], [1], [0, 0, 1, 1], [], []>} : vector<16x8xf32>, vector<8x16xf32>, vector<16x16xf32> -> vector<16x16xf32>
    %c5 = arith.constant 5 : index
    %c0_22 = arith.constant 0 : index
    %c0_23 = arith.constant 0 : index
    %31 = vector.load %arg4[%c5, %c0_22, %c0_23] : memref<8x16x16xf32, #tpu.memory_space<vmem>>, vector<1x16x16xf32>
    %32 = vector.shape_cast %31 : vector<1x16x16xf32> to vector<16x16xf32>
    %33 = vector.shape_cast %30 : vector<16x16xf32> to vector<1x16x16xf32>
    tpu.vector_store %arg4[%c5, %c0_22, %c0_23], %33 {strides = array<i32>} : memref<8x16x16xf32, #tpu.memory_space<vmem>>, vector<1x16x16xf32>,
    %34 = vector.extract_strided_slice %2 {offsets = [48, 0], sizes = [8, 16], strides = [1, 1]} : vector<64x16xf32> to vector<8x16xf32>
    %cst_24 = arith.constant dense<0.000000e+00> : vector<16x16xf32>
    %35 = tpu.matmul %3, %34, %cst_24 {dimension_numbers = #tpu.dot_dimension_numbers<[1], [0], [0], [1], [0, 0, 1, 1], [], []>} : vector<16x8xf32>, vector<8x16xf32>, vector<16x16xf32> -> vector<16x16xf32>
    %c6 = arith.constant 6 : index
    %c0_25 = arith.constant 0 : index
    %c0_26 = arith.constant 0 : index
    %36 = vector.load %arg4[%c6, %c0_25, %c0_26] : memref<8x16x16xf32, #tpu.memory_space<vmem>>, vector<1x16x16xf32>
    %37 = vector.shape_cast %36 : vector<1x16x16xf32> to vector<16x16xf32>
    %38 = vector.shape_cast %35 : vector<16x16xf32> to vector<1x16x16xf32>
    tpu.vector_store %arg4[%c6, %c0_25, %c0_26], %38 {strides = array<i32>} : memref<8x16x16xf32, #tpu.memory_space<vmem>>, vector<1x16x16xf32>,
    %39 = vector.extract_strided_slice %2 {offsets = [56, 0], sizes = [8, 16], strides = [1, 1]} : vector<64x16xf32> to vector<8x16xf32>
    %cst_27 = arith.constant dense<0.000000e+00> : vector<16x16xf32>
    %40 = tpu.matmul %3, %39, %cst_27 {dimension_numbers = #tpu.dot_dimension_numbers<[1], [0], [0], [1], [0, 0, 1, 1], [], []>} : vector<16x8xf32>, vector<8x16xf32>, vector<16x16xf32> -> vector<16x16xf32>
    %c7 = arith.constant 7 : index
    %c0_28 = arith.constant 0 : index
    %c0_29 = arith.constant 0 : index
    %41 = vector.load %arg4[%c7, %c0_28, %c0_29] : memref<8x16x16xf32, #tpu.memory_space<vmem>>, vector<1x16x16xf32>
    %42 = vector.shape_cast %41 : vector<1x16x16xf32> to vector<16x16xf32>
    %43 = vector.shape_cast %40 : vector<16x16xf32> to vector<1x16x16xf32>
    tpu.vector_store %arg4[%c7, %c0_28, %c0_29], %43 {strides = array<i32>} : memref<8x16x16xf32, #tpu.memory_space<vmem>>, vector<1x16x16xf32>,
    return
  }
  func.func @transform_0(%arg0: i32) -> (i32, i32) {
    %c0_i32 = arith.constant 0 : i32
    %c0_i32_0 = arith.constant 0 : i32
    %c0_i32_1 = arith.constant 0 : i32
    return %c0_i32, %c0_i32_0 : i32, i32
  }
  func.func @transform_1(%arg0: i32) -> (i32, i32) {
    %c0_i32 = arith.constant 0 : i32
    %c0_i32_0 = arith.constant 0 : i32
    %c0_i32_1 = arith.constant 0 : i32
    return %c0_i32, %c0_i32_0 : i32, i32
  }
  func.func @transform_2(%arg0: i32) -> (i32, i32) {
    %c0_i32 = arith.constant 0 : i32
    %c0_i32_0 = arith.constant 0 : i32
    %c0_i32_1 = arith.constant 0 : i32
    return %c0_i32, %c0_i32_0 : i32, i32
  }
  func.func @transform_3(%arg0: i32) -> (i32, i32, i32) {
    %c0_i32 = arith.constant 0 : i32
    %c0_i32_0 = arith.constant 0 : i32
    %c0_i32_1 = arith.constant 0 : i32
    %c0_i32_2 = arith.constant 0 : i32
    return %c0_i32, %c0_i32_0, %c0_i32_1 : i32, i32, i32
  }
}

</mosaic_0001>

<llo_original>
// kernel: tpu_custom_call.1
$region0: #{tpu_custom_call.1}
  #allocation0 [shape = 'u32[]', space=smem, size = 0x4, offset = 0x4, fixed_abs, tag = 'smem constant byte address 0x4 - core index']
  #allocation1 [shape = 'u32[144,128]{1,0:T(1,128)}', space=vmem, size = 0x12000, scoped, tag = 'internal scratch']
  %s0 = inlined_call_operand.vmem [shape: f32[64,8], index: 0, kind: input, shape index: {}]
  %s1 = inlined_call_operand.vmem [shape: f32[16,8], index: 1, kind: input, shape index: {}]
  %s2 = inlined_call_operand.vmem [shape: f32[8,16], index: 2, kind: input, shape index: {}]
  %s3 = inlined_call_operand.hbm [shape: f32[8,16,16], index: 3, kind: output, shape index: {}]
  %s4 = sld [smem:[#allocation0]]
  $region22: #{tpu_custom_call.1} parent=0
    _
  %s6 = ssub.s32 1, %s4
  %s7 = scalar_select 0, %s6, %s4
  $region1: #{tpu_custom_call.1} parent=0
    #allocation2 [shape = 'u8[65536]{0}', space=vmem, size = 0x10000, scoped, tag = 'output window, operand 0, single buffered']
    #allocation3 [shape = 's32[1]{0}', space=sflag, size = 0x4, scoped, tag = 'scoped memory for tpu_custom_call.1']
    %8 = vsyncpa [#allocation3], 0
    // Predicated region
    $region2: #{tpu_custom_call.1} parent=1 // pred_check
      _
    $region3: #{tpu_custom_call.1} parent=1 // pred_check_branch
      %10 = sbr.rel (0) target = $region5
    $region4: #{tpu_custom_call.1} parent=1 // pred_region
      _
    $region5: #{tpu_custom_call.1} parent=1 // pred_fallthru
      _
    // Predicated region
    $region6: #{tpu_custom_call.1} parent=1 // pred_check
      _
    $region7: #{tpu_custom_call.1} parent=1 // pred_check_branch
      %12 = sbr.rel (0) target = $region9
    $region8: #{tpu_custom_call.1} parent=1 // pred_region
      _
    $region9: #{tpu_custom_call.1} parent=1 // pred_fallthru
      _
    // Predicated region
    $region10: #{tpu_custom_call.1} parent=1 // pred_check
      _
    $region11: #{tpu_custom_call.1} parent=1 // pred_check_branch
      %14 = sbr.rel (0) target = $region13
    $region12: #{tpu_custom_call.1} parent=1 // pred_region
      _
    $region13: #{tpu_custom_call.1} parent=1 // pred_fallthru
      _
    %v15 = vld [vmem:[%s0] sm:$0xff]
    %v16 = vld [vmem:[%s0 + $0x8] sm:$0xff]
    %v17 = vld [vmem:[%s0 + $0x10] sm:$0xff]
    %v18 = vld [vmem:[%s0 + $0x18] sm:$0xff]
    %v19 = vld [vmem:[%s0 + $0x20] sm:$0xff]
    %v20 = vld [vmem:[%s0 + $0x28] sm:$0xff]
    %v21 = vld [vmem:[%s0 + $0x30] sm:$0xff]
    %v22 = vld [vmem:[%s0 + $0x38] sm:$0xff]
    %v23 = vld [vmem:[%s2] sm:$0xff]
    %vm24 = vcmask 64512
    %v26 = vsel %vm24, %v15, 0
    %v29 = vsel %vm24, %v16, 0
    %v32 = vsel %vm24, %v17, 0
    %v35 = vsel %vm24, %v18, 0
    %v38 = vsel %vm24, %v19, 0
    %v41 = vsel %vm24, %v20, 0
    %v44 = vsel %vm24, %v21, 0
    %v47 = vsel %vm24, %v22, 0
    %49 = vmatprep.subr.mxu0 0.0
    %50 = vmatpush1.msra.mxu0 %v23
    %51 = vmatprep.subr.mxu0 0.0
    %52 = vmatpush1.msra.mxu0 0.0
    %53 = vmatprep.subr.mxu0 0.0
    %54 = vmatpush1.msra.mxu0 0.0
    %55 = vmatprep.subr.mxu0 0.0
    %56 = vmatpush1.msra.mxu0 0.0
    %57 = vmatprep.subr.mxu0 0.0
    %58 = vmatpush1.msra.mxu0 0.0
    %59 = vmatprep.subr.mxu0 0.0
    %60 = vmatpush1.msra.mxu0 0.0
    %61 = vmatprep.subr.mxu0 0.0
    %62 = vmatpush1.msra.mxu0 0.0
    %63 = vmatprep.subr.mxu0 0.0
    %64 = vmatpush1.msra.mxu0 0.0
    %65 = vmatprep.subr.mxu0 0.0
    %66 = vmatpush1.msra.mxu0 0.0
    %67 = vmatprep.subr.mxu0 0.0
    %68 = vmatpush1.msra.mxu0 0.0
    %69 = vmatprep.subr.mxu0 0.0
    %70 = vmatpush1.msra.mxu0 0.0
    %71 = vmatprep.subr.mxu0 0.0
    %72 = vmatpush1.msra.mxu0 0.0
    %73 = vmatprep.subr.mxu0 0.0
    %74 = vmatpush1.msra.mxu0 0.0
    %75 = vmatprep.subr.mxu0 0.0
    %76 = vmatpush1.msra.mxu0 0.0
    %77 = vmatprep.subr.mxu0 0.0
    %78 = vmatpush1.msra.mxu0 0.0
    %79 = vmatprep.subr.mxu0 0.0
    %80 = vmatpush1.msra.mxu0 0.0
    %81 = vmatprep.subr.mxu0 0.0
    %82 = vmatpush1.msra.mxu0 0.0
    %83 = vmatprep.subr.mxu0 0.0
    %84 = vmatpush1.msra.mxu0 0.0
    %85 = vmatprep.subr.mxu0 0.0
    %86 = vmatpush1.msra.mxu0 0.0
    %87 = vmatprep.subr.mxu0 0.0
    %88 = vmatpush1.msra.mxu0 0.0
    %89 = vmatprep.subr.mxu0 0.0
    %90 = vmatpush1.msra.mxu0 0.0
    %91 = vmatprep.subr.mxu0 0.0
    %92 = vmatpush1.msra.mxu0 0.0
    %93 = vmatprep.subr.mxu0 0.0
    %94 = vmatpush1.msra.mxu0 0.0
    %95 = vmatprep.subr.mxu0 0.0
    %96 = vmatpush1.msra.mxu0 0.0
    %97 = vmatprep.subr.mxu0 0.0
    %98 = vmatpush1.msra.mxu0 0.0
    %99 = vmatprep.subr.mxu0 0.0
    %100 = vmatpush1.msra.mxu0 0.0
    %101 = vmatprep.subr.mxu0 0.0
    %102 = vmatpush1.msra.mxu0 0.0
    %103 = vmatprep.subr.mxu0 0.0
    %104 = vmatpush1.msra.mxu0 0.0
    %105 = vmatprep.subr.mxu0 0.0
    %106 = vmatpush1.msra.mxu0 0.0
    %107 = vmatprep.subr.mxu0 0.0
    %108 = vmatpush1.msra.mxu0 0.0
    %109 = vmatprep.subr.mxu0 0.0
    %110 = vmatpush1.msra.mxu0 0.0
    %111 = vmatprep.subr.mxu0 0.0
    %112 = vmatpush1.msra.mxu0 0.0
    %113 = vmatprep.mubr.f32.mxu0 0.0
    %114 = vmatmul.mubr.f32.gmra.mrb[0].mxu0 %v26
    %v115 = vpop.f32.mrb[0].mxu0
    %v116 = vadd.f32 0.0, %v115
    %v117 = vpop.f32.mrb[0].mxu0
    %118 = vmatprep.mubr.f32.mxu0 0.0
    %119 = vmatmul.mubr.f32.gmra.mrb[0].mxu0 %v29
    %v120 = vpop.f32.mrb[0].mxu0
    %v121 = vadd.f32 0.0, %v120
    %v122 = vpop.f32.mrb[0].mxu0
    %123 = vmatprep.mubr.f32.mxu0 0.0
    %124 = vmatmul.mubr.f32.gmra.mrb[0].mxu0 %v32
    %v125 = vpop.f32.mrb[0].mxu0
    %v126 = vadd.f32 0.0, %v125
    %v127 = vpop.f32.mrb[0].mxu0
    %128 = vmatprep.mubr.f32.mxu0 0.0
    %129 = vmatmul.mubr.f32.gmra.mrb[0].mxu0 %v35
    %v130 = vpop.f32.mrb[0].mxu0
    %v131 = vadd.f32 0.0, %v130
    %v132 = vpop.f32.mrb[0].mxu0
    %133 = vmatprep.mubr.f32.mxu0 0.0
    %134 = vmatmul.mubr.f32.gmra.mrb[0].mxu0 %v38
    %v135 = vpop.f32.mrb[0].mxu0
    %v136 = vadd.f32 0.0, %v135
    %v137 = vpop.f32.mrb[0].mxu0
    %138 = vmatprep.mubr.f32.mxu0 0.0
    %139 = vmatmul.mubr.f32.gmra.mrb[0].mxu0 %v41
    %v140 = vpop.f32.mrb[0].mxu0
    %v141 = vadd.f32 0.0, %v140
    %v142 = vpop.f32.mrb[0].mxu0
    %143 = vmatprep.mubr.f32.mxu0 0.0
    %144 = vmatmul.mubr.f32.gmra.mrb[0].mxu0 %v44
    %v145 = vpop.f32.mrb[0].mxu0
    %v146 = vadd.f32 0.0, %v145
    %v147 = vpop.f32.mrb[0].mxu0
    %148 = vmatprep.mubr.f32.mxu0 0.0
    %149 = vmatmul.mubr.f32.gmra.mrb[0].mxu0 %v47
    %v150 = vpop.f32.mrb[0].mxu0
    %v151 = vadd.f32 0.0, %v150
    %v152 = vpop.f32.mrb[0].mxu0
    %153 = vdwg.mxu0
    %v154 = vld [vmem:[%s1] sm:$0xff]
    %v155 = vld [vmem:[%s1 + $0x8] sm:$0xff]
    %v157 = vsel %vm24, %v154, 0
    %v160 = vsel %vm24, %v155, 0
    %162 = vmatprep.subr.mxu0 0.0
    %163 = vmatpush1.msra.mxu0 %v116
    %164 = vmatprep.subr.mxu0 0.0
    %165 = vmatpush1.msra.mxu0 0.0
    %166 = vmatprep.subr.mxu0 0.0
    %167 = vmatpush1.msra.mxu0 0.0
    %168 = vmatprep.subr.mxu0 0.0
    %169 = vmatpush1.msra.mxu0 0.0
    %170 = vmatprep.subr.mxu0 0.0
    %171 = vmatpush1.msra.mxu0 0.0
    %172 = vmatprep.subr.mxu0 0.0
    %173 = vmatpush1.msra.mxu0 0.0
    %174 = vmatprep.subr.mxu0 0.0
    %175 = vmatpush1.msra.mxu0 0.0
    %176 = vmatprep.subr.mxu0 0.0
    %177 = vmatpush1.msra.mxu0 0.0
    %178 = vmatprep.subr.mxu0 0.0
    %179 = vmatpush1.msra.mxu0 0.0
    %180 = vmatprep.subr.mxu0 0.0
    %181 = vmatpush1.msra.mxu0 0.0
    %182 = vmatprep.subr.mxu0 0.0
    %183 = vmatpush1.msra.mxu0 0.0
    %184 = vmatprep.subr.mxu0 0.0
    %185 = vmatpush1.msra.mxu0 0.0
    %186 = vmatprep.subr.mxu0 0.0
    %187 = vmatpush1.msra.mxu0 0.0
    %188 = vmatprep.subr.mxu0 0.0
    %189 = vmatpush1.msra.mxu0 0.0
    %190 = vmatprep.subr.mxu0 0.0
    %191 = vmatpush1.msra.mxu0 0.0
    %192 = vmatprep.subr.mxu0 0.0
    %193 = vmatpush1.msra.mxu0 0.0
    %194 = vmatprep.subr.mxu0 0.0
    %195 = vmatpush1.msra.mxu0 0.0
    %196 = vmatprep.subr.mxu0 0.0
    %197 = vmatpush1.msra.mxu0 0.0
    %198 = vmatprep.subr.mxu0 0.0
    %199 = vmatpush1.msra.mxu0 0.0
    %200 = vmatprep.subr.mxu0 0.0
    %201 = vmatpush1.msra.mxu0 0.0
    %202 = vmatprep.subr.mxu0 0.0
    %203 = vmatpush1.msra.mxu0 0.0
    %204 = vmatprep.subr.mxu0 0.0
    %205 = vmatpush1.msra.mxu0 0.0
    %206 = vmatprep.subr.mxu0 0.0
    %207 = vmatpush1.msra.mxu0 0.0
    %208 = vmatprep.subr.mxu0 0.0
    %209 = vmatpush1.msra.mxu0 0.0
    %210 = vmatprep.subr.mxu0 0.0
    %211 = vmatpush1.msra.mxu0 0.0
    %212 = vmatprep.subr.mxu0 0.0
    %213 = vmatpush1.msra.mxu0 0.0
    %214 = vmatprep.subr.mxu0 0.0
    %215 = vmatpush1.msra.mxu0 0.0
    %216 = vmatprep.subr.mxu0 0.0
    %217 = vmatpush1.msra.mxu0 0.0
    %218 = vmatprep.subr.mxu0 0.0
    %219 = vmatpush1.msra.mxu0 0.0
    %220 = vmatprep.subr.mxu0 0.0
    %221 = vmatpush1.msra.mxu0 0.0
    %222 = vmatprep.subr.mxu0 0.0
    %223 = vmatpush1.msra.mxu0 0.0
    %224 = vmatprep.subr.mxu0 0.0
    %225 = vmatpush1.msra.mxu0 0.0
    %226 = vmatprep.mubr.f32.mxu0 0.0
    %227 = vmatmul.mubr.f32.gmra.mrb[0].mxu0 %v157
    %v228 = vpop.f32.mrb[0].mxu0
    %v229 = vadd.f32 0.0, %v228
    %v230 = vpop.f32.mrb[0].mxu0
    %231 = vmatprep.mubr.f32.mxu0 0.0
    %232 = vmatmul.mubr.f32.gmra.mrb[0].mxu0 %v160
    %v233 = vpop.f32.mrb[0].mxu0
    %v234 = vadd.f32 0.0, %v233
    %v235 = vpop.f32.mrb[0].mxu0
    %236 = vdwg.mxu0
    %vm237 = vcmask 130048
    %238 = vst.msk [vmem:[#allocation2] sm:$0xff] %vm237, %v229
    %239 = vst.msk [vmem:[#allocation2 + $0x8] sm:$0xff] %vm237, %v234
    %240 = vmatprep.subr.mxu0 0.0
    %241 = vmatpush1.msra.mxu0 %v121
    %242 = vmatprep.subr.mxu0 0.0
    %243 = vmatpush1.msra.mxu0 0.0
    %244 = vmatprep.subr.mxu0 0.0
    %245 = vmatpush1.msra.mxu0 0.0
    %246 = vmatprep.subr.mxu0 0.0
    %247 = vmatpush1.msra.mxu0 0.0
    %248 = vmatprep.subr.mxu0 0.0
    %249 = vmatpush1.msra.mxu0 0.0
    %250 = vmatprep.subr.mxu0 0.0
    %251 = vmatpush1.msra.mxu0 0.0
    %252 = vmatprep.subr.mxu0 0.0
    %253 = vmatpush1.msra.mxu0 0.0
    %254 = vmatprep.subr.mxu0 0.0
    %255 = vmatpush1.msra.mxu0 0.0
    %256 = vmatprep.subr.mxu0 0.0
    %257 = vmatpush1.msra.mxu0 0.0
    %258 = vmatprep.subr.mxu0 0.0
    %259 = vmatpush1.msra.mxu0 0.0
    %260 = vmatprep.subr.mxu0 0.0
    %261 = vmatpush1.msra.mxu0 0.0
    %262 = vmatprep.subr.mxu0 0.0
    %263 = vmatpush1.msra.mxu0 0.0
    %264 = vmatprep.subr.mxu0 0.0
    %265 = vmatpush1.msra.mxu0 0.0
    %266 = vmatprep.subr.mxu0 0.0
    %267 = vmatpush1.msra.mxu0 0.0
    %268 = vmatprep.subr.mxu0 0.0
    %269 = vmatpush1.msra.mxu0 0.0
    %270 = vmatprep.subr.mxu0 0.0
    %271 = vmatpush1.msra.mxu0 0.0
    %272 = vmatprep.subr.mxu0 0.0
    %273 = vmatpush1.msra.mxu0 0.0
    %274 = vmatprep.subr.mxu0 0.0
    %275 = vmatpush1.msra.mxu0 0.0
    %276 = vmatprep.subr.mxu0 0.0
    %277 = vmatpush1.msra.mxu0 0.0
    %278 = vmatprep.subr.mxu0 0.0
    %279 = vmatpush1.msra.mxu0 0.0
    %280 = vmatprep.subr.mxu0 0.0
    %281 = vmatpush1.msra.mxu0 0.0
    %282 = vmatprep.subr.mxu0 0.0
    %283 = vmatpush1.msra.mxu0 0.0
    %284 = vmatprep.subr.mxu0 0.0
    %285 = vmatpush1.msra.mxu0 0.0
    %286 = vmatprep.subr.mxu0 0.0
    %287 = vmatpush1.msra.mxu0 0.0
    %288 = vmatprep.subr.mxu0 0.0
    %289 = vmatpush1.msra.mxu0 0.0
    %290 = vmatprep.subr.mxu0 0.0
    %291 = vmatpush1.msra.mxu0 0.0
    %292 = vmatprep.subr.mxu0 0.0
    %293 = vmatpush1.msra.mxu0 0.0
    %294 = vmatprep.subr.mxu0 0.0
    %295 = vmatpush1.msra.mxu0 0.0
    %296 = vmatprep.subr.mxu0 0.0
    %297 = vmatpush1.msra.mxu0 0.0
    %298 = vmatprep.subr.mxu0 0.0
    %299 = vmatpush1.msra.mxu0 0.0
    %300 = vmatprep.subr.mxu0 0.0
    %301 = vmatpush1.msra.mxu0 0.0
    %302 = vmatprep.subr.mxu0 0.0
    %303 = vmatpush1.msra.mxu0 0.0
    %304 = vmatprep.mubr.f32.mxu0 0.0
    %305 = vmatmul.mubr.f32.gmra.mrb[0].mxu0 %v157
    %v306 = vpop.f32.mrb[0].mxu0
    %v307 = vadd.f32 0.0, %v306
    %v308 = vpop.f32.mrb[0].mxu0
    %309 = vmatprep.mubr.f32.mxu0 0.0
    %310 = vmatmul.mubr.f32.gmra.mrb[0].mxu0 %v160
    %v311 = vpop.f32.mrb[0].mxu0
    %v312 = vadd.f32 0.0, %v311
    %v313 = vpop.f32.mrb[0].mxu0
    %314 = vdwg.mxu0
    %s315 = scalar_lea.vmem [#allocation2], 16
    %316 = vst.msk [vmem:[%s315] sm:$0xff] %vm237, %v307
    %317 = vst.msk [vmem:[%s315 + $0x8] sm:$0xff] %vm237, %v312
    %318 = vmatprep.subr.mxu0 0.0
    %319 = vmatpush1.msra.mxu0 %v126
    %320 = vmatprep.subr.mxu0 0.0
    %321 = vmatpush1.msra.mxu0 0.0
    %322 = vmatprep.subr.mxu0 0.0
    %323 = vmatpush1.msra.mxu0 0.0
    %324 = vmatprep.subr.mxu0 0.0
    %325 = vmatpush1.msra.mxu0 0.0
    %326 = vmatprep.subr.mxu0 0.0
    %327 = vmatpush1.msra.mxu0 0.0
    %328 = vmatprep.subr.mxu0 0.0
    %329 = vmatpush1.msra.mxu0 0.0
    %330 = vmatprep.subr.mxu0 0.0
    %331 = vmatpush1.msra.mxu0 0.0
    %332 = vmatprep.subr.mxu0 0.0
    %333 = vmatpush1.msra.mxu0 0.0
    %334 = vmatprep.subr.mxu0 0.0
    %335 = vmatpush1.msra.mxu0 0.0
    %336 = vmatprep.subr.mxu0 0.0
    %337 = vmatpush1.msra.mxu0 0.0
    %338 = vmatprep.subr.mxu0 0.0
    %339 = vmatpush1.msra.mxu0 0.0
    %340 = vmatprep.subr.mxu0 0.0
    %341 = vmatpush1.msra.mxu0 0.0
    %342 = vmatprep.subr.mxu0 0.0
    %343 = vmatpush1.msra.mxu0 0.0
    %344 = vmatprep.subr.mxu0 0.0
    %345 = vmatpush1.msra.mxu0 0.0
    %346 = vmatprep.subr.mxu0 0.0
    %347 = vmatpush1.msra.mxu0 0.0
    %348 = vmatprep.subr.mxu0 0.0
    %349 = vmatpush1.msra.mxu0 0.0
    %350 = vmatprep.subr.mxu0 0.0
    %351 = vmatpush1.msra.mxu0 0.0
    %352 = vmatprep.subr.mxu0 0.0
    %353 = vmatpush1.msra.mxu0 0.0
    %354 = vmatprep.subr.mxu0 0.0
    %355 = vmatpush1.msra.mxu0 0.0
    %356 = vmatprep.subr.mxu0 0.0
    %357 = vmatpush1.msra.mxu0 0.0
    %358 = vmatprep.subr.mxu0 0.0
    %359 = vmatpush1.msra.mxu0 0.0
    %360 = vmatprep.subr.mxu0 0.0
    %361 = vmatpush1.msra.mxu0 0.0
    %362 = vmatprep.subr.mxu0 0.0
    %363 = vmatpush1.msra.mxu0 0.0
    %364 = vmatprep.subr.mxu0 0.0
    %365 = vmatpush1.msra.mxu0 0.0
    %366 = vmatprep.subr.mxu0 0.0
    %367 = vmatpush1.msra.mxu0 0.0
    %368 = vmatprep.subr.mxu0 0.0
    %369 = vmatpush1.msra.mxu0 0.0
    %370 = vmatprep.subr.mxu0 0.0
    %371 = vmatpush1.msra.mxu0 0.0
    %372 = vmatprep.subr.mxu0 0.0
    %373 = vmatpush1.msra.mxu0 0.0
    %374 = vmatprep.subr.mxu0 0.0
    %375 = vmatpush1.msra.mxu0 0.0
    %376 = vmatprep.subr.mxu0 0.0
    %377 = vmatpush1.msra.mxu0 0.0
    %378 = vmatprep.subr.mxu0 0.0
    %379 = vmatpush1.msra.mxu0 0.0
    %380 = vmatprep.subr.mxu0 0.0
    %381 = vmatpush1.msra.mxu0 0.0
    %382 = vmatprep.mubr.f32.mxu0 0.0
    %383 = vmatmul.mubr.f32.gmra.mrb[0].mxu0 %v157
    %v384 = vpop.f32.mrb[0].mxu0
    %v385 = vadd.f32 0.0, %v384
    %v386 = vpop.f32.mrb[0].mxu0
    %387 = vmatprep.mubr.f32.mxu0 0.0
    %388 = vmatmul.mubr.f32.gmra.mrb[0].mxu0 %v160
    %v389 = vpop.f32.mrb[0].mxu0
    %v390 = vadd.f32 0.0, %v389
    %v391 = vpop.f32.mrb[0].mxu0
    %392 = vdwg.mxu0
    %s393 = scalar_lea.vmem [#allocation2], 32
    %394 = vst.msk [vmem:[%s393] sm:$0xff] %vm237, %v385
    %395 = vst.msk [vmem:[%s393 + $0x8] sm:$0xff] %vm237, %v390
    %396 = vmatprep.subr.mxu0 0.0
    %397 = vmatpush1.msra.mxu0 %v131
    %398 = vmatprep.subr.mxu0 0.0
    %399 = vmatpush1.msra.mxu0 0.0
    %400 = vmatprep.subr.mxu0 0.0
    %401 = vmatpush1.msra.mxu0 0.0
    %402 = vmatprep.subr.mxu0 0.0
    %403 = vmatpush1.msra.mxu0 0.0
    %404 = vmatprep.subr.mxu0 0.0
    %405 = vmatpush1.msra.mxu0 0.0
    %406 = vmatprep.subr.mxu0 0.0
    %407 = vmatpush1.msra.mxu0 0.0
    %408 = vmatprep.subr.mxu0 0.0
    %409 = vmatpush1.msra.mxu0 0.0
    %410 = vmatprep.subr.mxu0 0.0
    %411 = vmatpush1.msra.mxu0 0.0
    %412 = vmatprep.subr.mxu0 0.0
    %413 = vmatpush1.msra.mxu0 0.0
    %414 = vmatprep.subr.mxu0 0.0
    %415 = vmatpush1.msra.mxu0 0.0
    %416 = vmatprep.subr.mxu0 0.0
    %417 = vmatpush1.msra.mxu0 0.0
    %418 = vmatprep.subr.mxu0 0.0
    %419 = vmatpush1.msra.mxu0 0.0
    %420 = vmatprep.subr.mxu0 0.0
    %421 = vmatpush1.msra.mxu0 0.0
    %422 = vmatprep.subr.mxu0 0.0
    %423 = vmatpush1.msra.mxu0 0.0
    %424 = vmatprep.subr.mxu0 0.0
    %425 = vmatpush1.msra.mxu0 0.0
    %426 = vmatprep.subr.mxu0 0.0
    %427 = vmatpush1.msra.mxu0 0.0
    %428 = vmatprep.subr.mxu0 0.0
    %429 = vmatpush1.msra.mxu0 0.0
    %430 = vmatprep.subr.mxu0 0.0
    %431 = vmatpush1.msra.mxu0 0.0
    %432 = vmatprep.subr.mxu0 0.0
    %433 = vmatpush1.msra.mxu0 0.0
    %434 = vmatprep.subr.mxu0 0.0
    %435 = vmatpush1.msra.mxu0 0.0
    %436 = vmatprep.subr.mxu0 0.0
    %437 = vmatpush1.msra.mxu0 0.0
    %438 = vmatprep.subr.mxu0 0.0
    %439 = vmatpush1.msra.mxu0 0.0
    %440 = vmatprep.subr.mxu0 0.0
    %441 = vmatpush1.msra.mxu0 0.0
    %442 = vmatprep.subr.mxu0 0.0
    %443 = vmatpush1.msra.mxu0 0.0
    %444 = vmatprep.subr.mxu0 0.0
    %445 = vmatpush1.msra.mxu0 0.0
    %446 = vmatprep.subr.mxu0 0.0
    %447 = vmatpush1.msra.mxu0 0.0
    %448 = vmatprep.subr.mxu0 0.0
    %449 = vmatpush1.msra.mxu0 0.0
    %450 = vmatprep.subr.mxu0 0.0
    %451 = vmatpush1.msra.mxu0 0.0
    %452 = vmatprep.subr.mxu0 0.0
    %453 = vmatpush1.msra.mxu0 0.0
    %454 = vmatprep.subr.mxu0 0.0
    %455 = vmatpush1.msra.mxu0 0.0
    %456 = vmatprep.subr.mxu0 0.0
    %457 = vmatpush1.msra.mxu0 0.0
    %458 = vmatprep.subr.mxu0 0.0
    %459 = vmatpush1.msra.mxu0 0.0
    %460 = vmatprep.mubr.f32.mxu0 0.0
    %461 = vmatmul.mubr.f32.gmra.mrb[0].mxu0 %v157
    %v462 = vpop.f32.mrb[0].mxu0
    %v463 = vadd.f32 0.0, %v462
    %v464 = vpop.f32.mrb[0].mxu0
    %465 = vmatprep.mubr.f32.mxu0 0.0
    %466 = vmatmul.mubr.f32.gmra.mrb[0].mxu0 %v160
    %v467 = vpop.f32.mrb[0].mxu0
    %v468 = vadd.f32 0.0, %v467
    %v469 = vpop.f32.mrb[0].mxu0
    %470 = vdwg.mxu0
    %s471 = scalar_lea.vmem [#allocation2], 48
    %472 = vst.msk [vmem:[%s471] sm:$0xff] %vm237, %v463
    %473 = vst.msk [vmem:[%s471 + $0x8] sm:$0xff] %vm237, %v468
    %474 = vmatprep.subr.mxu0 0.0
    %475 = vmatpush1.msra.mxu0 %v136
    %476 = vmatprep.subr.mxu0 0.0
    %477 = vmatpush1.msra.mxu0 0.0
    %478 = vmatprep.subr.mxu0 0.0
    %479 = vmatpush1.msra.mxu0 0.0
    %480 = vmatprep.subr.mxu0 0.0
    %481 = vmatpush1.msra.mxu0 0.0
    %482 = vmatprep.subr.mxu0 0.0
    %483 = vmatpush1.msra.mxu0 0.0
    %484 = vmatprep.subr.mxu0 0.0
    %485 = vmatpush1.msra.mxu0 0.0
    %486 = vmatprep.subr.mxu0 0.0
    %487 = vmatpush1.msra.mxu0 0.0
    %488 = vmatprep.subr.mxu0 0.0
    %489 = vmatpush1.msra.mxu0 0.0
    %490 = vmatprep.subr.mxu0 0.0
    %491 = vmatpush1.msra.mxu0 0.0
    %492 = vmatprep.subr.mxu0 0.0
    %493 = vmatpush1.msra.mxu0 0.0
    %494 = vmatprep.subr.mxu0 0.0
    %495 = vmatpush1.msra.mxu0 0.0
    %496 = vmatprep.subr.mxu0 0.0
    %497 = vmatpush1.msra.mxu0 0.0
    %498 = vmatprep.subr.mxu0 0.0
    %499 = vmatpush1.msra.mxu0 0.0
    %500 = vmatprep.subr.mxu0 0.0
    %501 = vmatpush1.msra.mxu0 0.0
    %502 = vmatprep.subr.mxu0 0.0
    %503 = vmatpush1.msra.mxu0 0.0
    %504 = vmatprep.subr.mxu0 0.0
    %505 = vmatpush1.msra.mxu0 0.0
    %506 = vmatprep.subr.mxu0 0.0
    %507 = vmatpush1.msra.mxu0 0.0
    %508 = vmatprep.subr.mxu0 0.0
    %509 = vmatpush1.msra.mxu0 0.0
    %510 = vmatprep.subr.mxu0 0.0
    %511 = vmatpush1.msra.mxu0 0.0
    %512 = vmatprep.subr.mxu0 0.0
    %513 = vmatpush1.msra.mxu0 0.0
    %514 = vmatprep.subr.mxu0 0.0
    %515 = vmatpush1.msra.mxu0 0.0
    %516 = vmatprep.subr.mxu0 0.0
    %517 = vmatpush1.msra.mxu0 0.0
    %518 = vmatprep.subr.mxu0 0.0
    %519 = vmatpush1.msra.mxu0 0.0
    %520 = vmatprep.subr.mxu0 0.0
    %521 = vmatpush1.msra.mxu0 0.0
    %522 = vmatprep.subr.mxu0 0.0
    %523 = vmatpush1.msra.mxu0 0.0
    %524 = vmatprep.subr.mxu0 0.0
    %525 = vmatpush1.msra.mxu0 0.0
    %526 = vmatprep.subr.mxu0 0.0
    %527 = vmatpush1.msra.mxu0 0.0
    %528 = vmatprep.subr.mxu0 0.0
    %529 = vmatpush1.msra.mxu0 0.0
    %530 = vmatprep.subr.mxu0 0.0
    %531 = vmatpush1.msra.mxu0 0.0
    %532 = vmatprep.subr.mxu0 0.0
    %533 = vmatpush1.msra.mxu0 0.0
    %534 = vmatprep.subr.mxu0 0.0
    %535 = vmatpush1.msra.mxu0 0.0
    %536 = vmatprep.subr.mxu0 0.0
    %537 = vmatpush1.msra.mxu0 0.0
    %538 = vmatprep.mubr.f32.mxu0 0.0
    %539 = vmatmul.mubr.f32.gmra.mrb[0].mxu0 %v157
    %v540 = vpop.f32.mrb[0].mxu0
    %v541 = vadd.f32 0.0, %v540
    %v542 = vpop.f32.mrb[0].mxu0
    %543 = vmatprep.mubr.f32.mxu0 0.0
    %544 = vmatmul.mubr.f32.gmra.mrb[0].mxu0 %v160
    %v545 = vpop.f32.mrb[0].mxu0
    %v546 = vadd.f32 0.0, %v545
    %v547 = vpop.f32.mrb[0].mxu0
    %548 = vdwg.mxu0
    %s549 = scalar_lea.vmem [#allocation2], 64
    %550 = vst.msk [vmem:[%s549] sm:$0xff] %vm237, %v541
    %551 = vst.msk [vmem:[%s549 + $0x8] sm:$0xff] %vm237, %v546
    %552 = vmatprep.subr.mxu0 0.0
    %553 = vmatpush1.msra.mxu0 %v141
    %554 = vmatprep.subr.mxu0 0.0
    %555 = vmatpush1.msra.mxu0 0.0
    %556 = vmatprep.subr.mxu0 0.0
    %557 = vmatpush1.msra.mxu0 0.0
    %558 = vmatprep.subr.mxu0 0.0
    %559 = vmatpush1.msra.mxu0 0.0
    %560 = vmatprep.subr.mxu0 0.0
    %561 = vmatpush1.msra.mxu0 0.0
    %562 = vmatprep.subr.mxu0 0.0
    %563 = vmatpush1.msra.mxu0 0.0
    %564 = vmatprep.subr.mxu0 0.0
    %565 = vmatpush1.msra.mxu0 0.0
    %566 = vmatprep.subr.mxu0 0.0
    %567 = vmatpush1.msra.mxu0 0.0
    %568 = vmatprep.subr.mxu0 0.0
    %569 = vmatpush1.msra.mxu0 0.0
    %570 = vmatprep.subr.mxu0 0.0
    %571 = vmatpush1.msra.mxu0 0.0
    %572 = vmatprep.subr.mxu0 0.0
    %573 = vmatpush1.msra.mxu0 0.0
    %574 = vmatprep.subr.mxu0 0.0
    %575 = vmatpush1.msra.mxu0 0.0
    %576 = vmatprep.subr.mxu0 0.0
    %577 = vmatpush1.msra.mxu0 0.0
    %578 = vmatprep.subr.mxu0 0.0
    %579 = vmatpush1.msra.mxu0 0.0
    %580 = vmatprep.subr.mxu0 0.0
    %581 = vmatpush1.msra.mxu0 0.0
    %582 = vmatprep.subr.mxu0 0.0
    %583 = vmatpush1.msra.mxu0 0.0
    %584 = vmatprep.subr.mxu0 0.0
    %585 = vmatpush1.msra.mxu0 0.0
    %586 = vmatprep.subr.mxu0 0.0
    %587 = vmatpush1.msra.mxu0 0.0
    %588 = vmatprep.subr.mxu0 0.0
    %589 = vmatpush1.msra.mxu0 0.0
    %590 = vmatprep.subr.mxu0 0.0
    %591 = vmatpush1.msra.mxu0 0.0
    %592 = vmatprep.subr.mxu0 0.0
    %593 = vmatpush1.msra.mxu0 0.0
    %594 = vmatprep.subr.mxu0 0.0
    %595 = vmatpush1.msra.mxu0 0.0
    %596 = vmatprep.subr.mxu0 0.0
    %597 = vmatpush1.msra.mxu0 0.0
    %598 = vmatprep.subr.mxu0 0.0
    %599 = vmatpush1.msra.mxu0 0.0
    %600 = vmatprep.subr.mxu0 0.0
    %601 = vmatpush1.msra.mxu0 0.0
    %602 = vmatprep.subr.mxu0 0.0
    %603 = vmatpush1.msra.mxu0 0.0
    %604 = vmatprep.subr.mxu0 0.0
    %605 = vmatpush1.msra.mxu0 0.0
    %606 = vmatprep.subr.mxu0 0.0
    %607 = vmatpush1.msra.mxu0 0.0
    %608 = vmatprep.subr.mxu0 0.0
    %609 = vmatpush1.msra.mxu0 0.0
    %610 = vmatprep.subr.mxu0 0.0
    %611 = vmatpush1.msra.mxu0 0.0
    %612 = vmatprep.subr.mxu0 0.0
    %613 = vmatpush1.msra.mxu0 0.0
    %614 = vmatprep.subr.mxu0 0.0
    %615 = vmatpush1.msra.mxu0 0.0
    %616 = vmatprep.mubr.f32.mxu0 0.0
    %617 = vmatmul.mubr.f32.gmra.mrb[0].mxu0 %v157
    %v618 = vpop.f32.mrb[0].mxu0
    %v619 = vadd.f32 0.0, %v618
    %v620 = vpop.f32.mrb[0].mxu0
    %621 = vmatprep.mubr.f32.mxu0 0.0
    %622 = vmatmul.mubr.f32.gmra.mrb[0].mxu0 %v160
    %v623 = vpop.f32.mrb[0].mxu0
    %v624 = vadd.f32 0.0, %v623
    %v625 = vpop.f32.mrb[0].mxu0
    %626 = vdwg.mxu0
    %s627 = scalar_lea.vmem [#allocation2], 80
    %628 = vst.msk [vmem:[%s627] sm:$0xff] %vm237, %v619
    %629 = vst.msk [vmem:[%s627 + $0x8] sm:$0xff] %vm237, %v624
    %630 = vmatprep.subr.mxu0 0.0
    %631 = vmatpush1.msra.mxu0 %v146
    %632 = vmatprep.subr.mxu0 0.0
    %633 = vmatpush1.msra.mxu0 0.0
    %634 = vmatprep.subr.mxu0 0.0
    %635 = vmatpush1.msra.mxu0 0.0
    %636 = vmatprep.subr.mxu0 0.0
    %637 = vmatpush1.msra.mxu0 0.0
    %638 = vmatprep.subr.mxu0 0.0
    %639 = vmatpush1.msra.mxu0 0.0
    %640 = vmatprep.subr.mxu0 0.0
    %641 = vmatpush1.msra.mxu0 0.0
    %642 = vmatprep.subr.mxu0 0.0
    %643 = vmatpush1.msra.mxu0 0.0
    %644 = vmatprep.subr.mxu0 0.0
    %645 = vmatpush1.msra.mxu0 0.0
    %646 = vmatprep.subr.mxu0 0.0
    %647 = vmatpush1.msra.mxu0 0.0
    %648 = vmatprep.subr.mxu0 0.0
    %649 = vmatpush1.msra.mxu0 0.0
    %650 = vmatprep.subr.mxu0 0.0
    %651 = vmatpush1.msra.mxu0 0.0
    %652 = vmatprep.subr.mxu0 0.0
    %653 = vmatpush1.msra.mxu0 0.0
    %654 = vmatprep.subr.mxu0 0.0
    %655 = vmatpush1.msra.mxu0 0.0
    %656 = vmatprep.subr.mxu0 0.0
    %657 = vmatpush1.msra.mxu0 0.0
    %658 = vmatprep.subr.mxu0 0.0
    %659 = vmatpush1.msra.mxu0 0.0
    %660 = vmatprep.subr.mxu0 0.0
    %661 = vmatpush1.msra.mxu0 0.0
    %662 = vmatprep.subr.mxu0 0.0
    %663 = vmatpush1.msra.mxu0 0.0
    %664 = vmatprep.subr.mxu0 0.0
    %665 = vmatpush1.msra.mxu0 0.0
    %666 = vmatprep.subr.mxu0 0.0
    %667 = vmatpush1.msra.mxu0 0.0
    %668 = vmatprep.subr.mxu0 0.0
    %669 = vmatpush1.msra.mxu0 0.0
    %670 = vmatprep.subr.mxu0 0.0
    %671 = vmatpush1.msra.mxu0 0.0
    %672 = vmatprep.subr.mxu0 0.0
    %673 = vmatpush1.msra.mxu0 0.0
    %674 = vmatprep.subr.mxu0 0.0
    %675 = vmatpush1.msra.mxu0 0.0
    %676 = vmatprep.subr.mxu0 0.0
    %677 = vmatpush1.msra.mxu0 0.0
    %678 = vmatprep.subr.mxu0 0.0
    %679 = vmatpush1.msra.mxu0 0.0
    %680 = vmatprep.subr.mxu0 0.0
    %681 = vmatpush1.msra.mxu0 0.0
    %682 = vmatprep.subr.mxu0 0.0
    %683 = vmatpush1.msra.mxu0 0.0
    %684 = vmatprep.subr.mxu0 0.0
    %685 = vmatpush1.msra.mxu0 0.0
    %686 = vmatprep.subr.mxu0 0.0
    %687 = vmatpush1.msra.mxu0 0.0
    %688 = vmatprep.subr.mxu0 0.0
    %689 = vmatpush1.msra.mxu0 0.0
    %690 = vmatprep.subr.mxu0 0.0
    %691 = vmatpush1.msra.mxu0 0.0
    %692 = vmatprep.subr.mxu0 0.0
    %693 = vmatpush1.msra.mxu0 0.0
    %694 = vmatprep.mubr.f32.mxu0 0.0
    %695 = vmatmul.mubr.f32.gmra.mrb[0].mxu0 %v157
    %v696 = vpop.f32.mrb[0].mxu0
    %v697 = vadd.f32 0.0, %v696
    %v698 = vpop.f32.mrb[0].mxu0
    %699 = vmatprep.mubr.f32.mxu0 0.0
    %700 = vmatmul.mubr.f32.gmra.mrb[0].mxu0 %v160
    %v701 = vpop.f32.mrb[0].mxu0
    %v702 = vadd.f32 0.0, %v701
    %v703 = vpop.f32.mrb[0].mxu0
    %704 = vdwg.mxu0
    %s705 = scalar_lea.vmem [#allocation2], 96
    %706 = vst.msk [vmem:[%s705] sm:$0xff] %vm237, %v697
    %707 = vst.msk [vmem:[%s705 + $0x8] sm:$0xff] %vm237, %v702
    %708 = vmatprep.subr.mxu0 0.0
    %709 = vmatpush1.msra.mxu0 %v151
    %710 = vmatprep.subr.mxu0 0.0
    %711 = vmatpush1.msra.mxu0 0.0
    %712 = vmatprep.subr.mxu0 0.0
    %713 = vmatpush1.msra.mxu0 0.0
    %714 = vmatprep.subr.mxu0 0.0
    %715 = vmatpush1.msra.mxu0 0.0
    %716 = vmatprep.subr.mxu0 0.0
    %717 = vmatpush1.msra.mxu0 0.0
    %718 = vmatprep.subr.mxu0 0.0
    %719 = vmatpush1.msra.mxu0 0.0
    %720 = vmatprep.subr.mxu0 0.0
    %721 = vmatpush1.msra.mxu0 0.0
    %722 = vmatprep.subr.mxu0 0.0
    %723 = vmatpush1.msra.mxu0 0.0
    %724 = vmatprep.subr.mxu0 0.0
    %725 = vmatpush1.msra.mxu0 0.0
    %726 = vmatprep.subr.mxu0 0.0
    %727 = vmatpush1.msra.mxu0 0.0
    %728 = vmatprep.subr.mxu0 0.0
    %729 = vmatpush1.msra.mxu0 0.0
    %730 = vmatprep.subr.mxu0 0.0
    %731 = vmatpush1.msra.mxu0 0.0
    %732 = vmatprep.subr.mxu0 0.0
    %733 = vmatpush1.msra.mxu0 0.0
    %734 = vmatprep.subr.mxu0 0.0
    %735 = vmatpush1.msra.mxu0 0.0
    %736 = vmatprep.subr.mxu0 0.0
    %737 = vmatpush1.msra.mxu0 0.0
    %738 = vmatprep.subr.mxu0 0.0
    %739 = vmatpush1.msra.mxu0 0.0
    %740 = vmatprep.subr.mxu0 0.0
    %741 = vmatpush1.msra.mxu0 0.0
    %742 = vmatprep.subr.mxu0 0.0
    %743 = vmatpush1.msra.mxu0 0.0
    %744 = vmatprep.subr.mxu0 0.0
    %745 = vmatpush1.msra.mxu0 0.0
    %746 = vmatprep.subr.mxu0 0.0
    %747 = vmatpush1.msra.mxu0 0.0
    %748 = vmatprep.subr.mxu0 0.0
    %749 = vmatpush1.msra.mxu0 0.0
    %750 = vmatprep.subr.mxu0 0.0
    %751 = vmatpush1.msra.mxu0 0.0
    %752 = vmatprep.subr.mxu0 0.0
    %753 = vmatpush1.msra.mxu0 0.0
    %754 = vmatprep.subr.mxu0 0.0
    %755 = vmatpush1.msra.mxu0 0.0
    %756 = vmatprep.subr.mxu0 0.0
    %757 = vmatpush1.msra.mxu0 0.0
    %758 = vmatprep.subr.mxu0 0.0
    %759 = vmatpush1.msra.mxu0 0.0
    %760 = vmatprep.subr.mxu0 0.0
    %761 = vmatpush1.msra.mxu0 0.0
    %762 = vmatprep.subr.mxu0 0.0
    %763 = vmatpush1.msra.mxu0 0.0
    %764 = vmatprep.subr.mxu0 0.0
    %765 = vmatpush1.msra.mxu0 0.0
    %766 = vmatprep.subr.mxu0 0.0
    %767 = vmatpush1.msra.mxu0 0.0
    %768 = vmatprep.subr.mxu0 0.0
    %769 = vmatpush1.msra.mxu0 0.0
    %770 = vmatprep.subr.mxu0 0.0
    %771 = vmatpush1.msra.mxu0 0.0
    %772 = vmatprep.mubr.f32.mxu0 0.0
    %773 = vmatmul.mubr.f32.gmra.mrb[0].mxu0 %v157
    %v774 = vpop.f32.mrb[0].mxu0
    %v775 = vadd.f32 0.0, %v774
    %v776 = vpop.f32.mrb[0].mxu0
    %777 = vmatprep.mubr.f32.mxu0 0.0
    %778 = vmatmul.mubr.f32.gmra.mrb[0].mxu0 %v160
    %v779 = vpop.f32.mrb[0].mxu0
    %v780 = vadd.f32 0.0, %v779
    %v781 = vpop.f32.mrb[0].mxu0
    %782 = vdwg.mxu0
    %s783 = scalar_lea.vmem [#allocation2], 112
    %784 = vst.msk [vmem:[%s783] sm:$0xff] %vm237, %v775
    %785 = vst.msk [vmem:[%s783 + $0x8] sm:$0xff] %vm237, %v780
    // Predicated region
    $region14: #{tpu_custom_call.1} parent=1 // pred_check
      _
    $region15: #{tpu_custom_call.1} parent=1 // pred_check_branch
      %787 = sbr.rel (0) target = $region17
    $region16: #{tpu_custom_call.1} parent=1 // pred_region
      %s789 = ssub.s32 2048, 2048
      %790 = vsyncadd [#allocation3], %s789
      %s791 = sshll.u32 [#allocation2], 4
      %s792 = int_to_ptr.vmem [resolvable:$true] %s791
      %797 = dma.vmem_to_hbm [thread:$0]  %s792, 2048, %s3, [#allocation3], 128, 128, 8
    $region17: #{tpu_custom_call.1} parent=1 // pred_fallthru
      _
    // Predicated region
    $region18: #{tpu_custom_call.1} parent=1 // pred_check
      _
    $region19: #{tpu_custom_call.1} parent=1 // pred_check_branch
      %799 = sbr.rel (0) target = $region21
    $region20: #{tpu_custom_call.1} parent=1 // pred_region
      %800 = dma.done [#allocation3], 2048
    $region21: #{tpu_custom_call.1} parent=1 // pred_fallthru
      _
    %801 = vsyncpa [#allocation3], 1

</llo_original>
